<compile_context>
chip_gen: v6e
topology: v6e:2x2x1
jax: 0.10.0
libtpu: 0.0.40
codegen_flags: <defaults>
</compile_context>

<pallas_src>
import jax
import jax.numpy as jnp
from jax.experimental import pallas as pl
from jax.experimental.pallas import tpu as pltpu

ALPHA = 0.25
GAMMA = 2.0
LANES = 128
TM_MAX = 1024       # max row tile (sublane-aligned); 512 KiB/input block in f32
NUM_CORES = 2       # leading "parallel" grid axis (megacore on v7x)
PAD_LOGIT = -100.0  # padding logit; with label 0 it contributes exactly 0 loss


def _focal_loss_kernel(logits_ref, label_ref, out_ref):
    i = pl.program_id(1)  # reduction axis (row tiles handled by this core)

    x = logits_ref[...].astype(jnp.float32)
    y = label_ref[...].astype(jnp.float32)

    # softplus(-|x|) = log1p(exp(-|x|)).  Given the torch.where structure, the
    # PyTorch softplus threshold=50 branches are never selected, so this is an
    # exact rewrite of:
    #   log_probs   = x >= 0 ?  softplus(x,-1,50) : x - softplus(x,1,50)
    #   log_1_probs = x >= 0 ? -x + softplus(x,-1,50) : -softplus(x,1,50)
    sp = jnp.log1p(jnp.exp(-jnp.abs(x)))
    log_probs = jnp.minimum(x, 0.0) - sp        # log(sigmoid(x))
    log_1_probs = jnp.minimum(-x, 0.0) - sp     # log(1 - sigmoid(x))

    probs = jnp.exp(log_probs)                  # sigmoid(x), single EUP op
    d = y - probs
    coeff = -(d * d)                            # -|y - p|^gamma, gamma == 2

    loss = (y * ALPHA * log_probs + (1.0 - y) * (1.0 - ALPHA) * log_1_probs) * coeff

    # Fold the (TM, 128) tile into an (8, 128) partial on the VPU (tile-aligned
    # reshape + vadds; no per-step cross-lane reduce, no narrow stores).
    partial = jnp.sum(loss.reshape(loss.shape[0] // 8, 8, LANES), axis=0)

    @pl.when(i == 0)
    def _():
        out_ref[...] = jnp.zeros_like(out_ref)

    out_ref[...] += partial[None, :, :]


def focal_loss_sum(logits, label):
    """Focal loss with reduction='sum', matching the PyTorch module."""
    assert logits.shape == label.shape
    total = logits.size

    # Pick the row tile: as large as possible (<= TM_MAX), multiple of 8,
    # split roughly evenly over NUM_CORES for small inputs.
    rows_needed = -(-total // LANES)
    rows_per_core = -(-rows_needed // NUM_CORES)
    tm = min(TM_MAX, max(8, ((rows_per_core + 7) // 8) * 8))
    chunk_rows = NUM_CORES * tm
    rows = -(-rows_needed // chunk_rows) * chunk_rows
    padded = rows * LANES
    pad = padded - total

    flat_logits = jnp.ravel(logits).astype(jnp.float32)
    flat_label = jnp.ravel(label).astype(jnp.float32)
    if pad:
        flat_logits = jnp.pad(flat_logits, (0, pad), constant_values=PAD_LOGIT)
        flat_label = jnp.pad(flat_label, (0, pad))  # zeros

    logits2d = flat_logits.reshape(rows, LANES)
    label2d = flat_label.reshape(rows, LANES)

    tiles_per_core = rows // chunk_rows
    grid = (NUM_CORES, tiles_per_core)

    in_map = lambda c, i: (c * tiles_per_core + i, 0)

    out = pl.pallas_call(
        _focal_loss_kernel,
        out_shape=jax.ShapeDtypeStruct((NUM_CORES, 8, LANES), jnp.float32),
        grid_spec=pltpu.PrefetchScalarGridSpec(
            num_scalar_prefetch=0,
            grid=grid,
            in_specs=[
                pl.BlockSpec((tm, LANES), in_map),
                pl.BlockSpec((tm, LANES), in_map),
            ],
            # Per-core resident accumulator block (lane-dense, constant over i).
            out_specs=pl.BlockSpec((1, 8, LANES), lambda c, i: (c, 0, 0)),
        ),
        compiler_params=pltpu.CompilerParams(
            dimension_semantics=("parallel", "arbitrary"),
        ),
    )(logits2d, label2d)

    # Final (tiny) cross-lane reduce happens once, outside the kernel.
    return jnp.sum(out)


def _focal_loss_ref(logits, label):
    """Pure-JAX reference mirroring the PyTorch forward exactly."""
    x = logits.astype(jnp.float32)
    y = label.astype(jnp.float32)
    probs = jax.nn.sigmoid(x)
    coeff = -(jnp.abs(y - probs) ** GAMMA)
    sp_neg = jnp.where(x < -50.0, x, -jnp.log1p(jnp.exp(-jnp.maximum(x, -50.0))))
    sp_pos = jnp.where(x > 50.0, x, jnp.log1p(jnp.exp(jnp.minimum(x, 50.0))))
    log_probs = jnp.where(x >= 0.0, sp_neg, x - sp_pos)
    log_1_probs = jnp.where(x >= 0.0, -x + sp_neg, -sp_pos)
    loss = y * ALPHA * log_probs + (1.0 - y) * (1.0 - ALPHA) * log_1_probs
    return jnp.sum(loss * coeff)


if __name__ == "__main__":
    key = jax.random.PRNGKey(0)
    k1, k2 = jax.random.split(key)

    # Small NCHW shapes consistent with a dense prediction head.
    N, C, H, W = 2, 4, 16, 16
    logits = jax.random.normal(k1, (N, C, H, W), dtype=jnp.float32) * 3.0
    label = (jax.random.uniform(k2, (N, C, H, W)) > 0.5).astype(jnp.float32)

    loss = focal_loss_sum(logits, label)
    loss = jax.block_until_ready(loss)

    ref = _focal_loss_ref(logits, label)
    assert jnp.allclose(loss, ref, rtol=2e-5, atol=1e-3), (loss, ref)

    print("KERNEL_OK")
</pallas_src>

<mosaic_0001>
module attributes {stable_mosaic.version = 11 : i64} {
  func.func @_focal_loss_kernel(%arg0: i32, %arg1: i32, %arg2: memref<8x128xf32, #tpu.memory_space<vmem>>, %arg3: memref<8x128xf32, #tpu.memory_space<vmem>>, %arg4: memref<1x8x128xf32, #tpu.memory_space<vmem>>) attributes {dimension_semantics = [#tpu.dimension_semantics<parallel>, #tpu.dimension_semantics<arbitrary>], iteration_bounds = array<i64: 2, 1>, scalar_prefetch = 0 : i64, scratch_operands = 0 : i64, tpu.core_type = #tpu.core_type<tc>, window_params = [{transform_indices = @transform_0, window_bounds = array<i64: 8, 128>}, {transform_indices = @transform_1, window_bounds = array<i64: 8, 128>}, {transform_indices = @transform_2, window_bounds = array<i64: 1, 8, 128>}]} {
    %c0 = arith.constant 0 : index
    %c0_0 = arith.constant 0 : index
    %0 = vector.load %arg2[%c0, %c0_0] : memref<8x128xf32, #tpu.memory_space<vmem>>, vector<8x128xf32>
    %c0_1 = arith.constant 0 : index
    %c0_2 = arith.constant 0 : index
    %1 = vector.load %arg3[%c0_1, %c0_2] : memref<8x128xf32, #tpu.memory_space<vmem>>, vector<8x128xf32>
    %2 = math.absf %0 : vector<8x128xf32>
    %cst = arith.constant 0.000000e+00 : f32
    %3 = vector.broadcast %cst : f32 to vector<8x128xf32>
    %4 = arith.subf %3, %2 : vector<8x128xf32>
    %5 = math.exp %4 : vector<8x128xf32>
    %6 = math.log1p %5 : vector<8x128xf32>
    %cst_3 = arith.constant 0.000000e+00 : f32
    %7 = vector.broadcast %cst_3 : f32 to vector<8x128xf32>
    %8 = arith.minimumf %0, %7 : vector<8x128xf32>
    %9 = arith.subf %8, %6 : vector<8x128xf32>
    %cst_4 = arith.constant 0.000000e+00 : f32
    %10 = vector.broadcast %cst_4 : f32 to vector<8x128xf32>
    %11 = arith.subf %10, %0 : vector<8x128xf32>
    %cst_5 = arith.constant 0.000000e+00 : f32
    %12 = vector.broadcast %cst_5 : f32 to vector<8x128xf32>
    %13 = arith.minimumf %11, %12 : vector<8x128xf32>
    %14 = arith.subf %13, %6 : vector<8x128xf32>
    %15 = math.exp %9 : vector<8x128xf32>
    %16 = arith.subf %1, %15 : vector<8x128xf32>
    %17 = arith.mulf %16, %16 : vector<8x128xf32>
    %cst_6 = arith.constant 0.000000e+00 : f32
    %18 = vector.broadcast %cst_6 : f32 to vector<8x128xf32>
    %19 = arith.subf %18, %17 : vector<8x128xf32>
    %cst_7 = arith.constant 2.500000e-01 : f32
    %20 = vector.broadcast %cst_7 : f32 to vector<8x128xf32>
    %21 = arith.mulf %1, %20 : vector<8x128xf32>
    %22 = arith.mulf %21, %9 : vector<8x128xf32>
    %cst_8 = arith.constant 1.000000e+00 : f32
    %23 = vector.broadcast %cst_8 : f32 to vector<8x128xf32>
    %24 = arith.subf %23, %1 : vector<8x128xf32>
    %cst_9 = arith.constant 7.500000e-01 : f32
    %25 = vector.broadcast %cst_9 : f32 to vector<8x128xf32>
    %26 = arith.mulf %24, %25 : vector<8x128xf32>
    %27 = arith.mulf %26, %14 : vector<8x128xf32>
    %28 = arith.addf %22, %27 : vector<8x128xf32>
    %29 = arith.mulf %28, %19 : vector<8x128xf32>
    %30 = vector.shape_cast %29 : vector<8x128xf32> to vector<1x8x128xf32>
    %cst_10 = arith.constant dense<0.000000e+00> : vector<8x128xf32>
    %31 = vector.multi_reduction <add>, %30, %cst_10 [0] : vector<1x8x128xf32> to vector<8x128xf32>
    %c0_i32 = arith.constant 0 : i32
    %32 = arith.cmpi eq, %arg1, %c0_i32 : i32
    %33 = arith.extui %32 : i1 to i32
    %c0_i32_11 = arith.constant 0 : i32
    %34 = arith.cmpi ne, %33, %c0_i32_11 : i32
    scf.if %34 {
      %cst_18 = arith.constant 0.000000e+00 : f32
      %39 = vector.broadcast %cst_18 : f32 to vector<1x8x128xf32>
      %c0_19 = arith.constant 0 : index
      %c0_20 = arith.constant 0 : index
      %c0_21 = arith.constant 0 : index
      %40 = vector.load %arg4[%c0_19, %c0_20, %c0_21] : memref<1x8x128xf32, #tpu.memory_space<vmem>>, vector<1x8x128xf32>
      tpu.vector_store %arg4[%c0_19, %c0_20, %c0_21], %39 {strides = array<i32>} : memref<1x8x128xf32, #tpu.memory_space<vmem>>, vector<1x8x128xf32>,
    } else {
    }
    %c0_12 = arith.constant 0 : index
    %c0_13 = arith.constant 0 : index
    %c0_14 = arith.constant 0 : index
    %35 = vector.load %arg4[%c0_12, %c0_13, %c0_14] : memref<1x8x128xf32, #tpu.memory_space<vmem>>, vector<1x8x128xf32>
    %36 = vector.shape_cast %31 : vector<8x128xf32> to vector<1x8x128xf32>
    %37 = arith.addf %35, %36 : vector<1x8x128xf32>
    %c0_15 = arith.constant 0 : index
    %c0_16 = arith.constant 0 : index
    %c0_17 = arith.constant 0 : index
    %38 = vector.load %arg4[%c0_15, %c0_16, %c0_17] : memref<1x8x128xf32, #tpu.memory_space<vmem>>, vector<1x8x128xf32>
    tpu.vector_store %arg4[%c0_15, %c0_16, %c0_17], %37 {strides = array<i32>} : memref<1x8x128xf32, #tpu.memory_space<vmem>>, vector<1x8x128xf32>,
    return
  }
  func.func @transform_0(%arg0: i32, %arg1: i32) -> (i32, i32) {
    %c1_i32 = arith.constant 1 : i32
    %0 = arith.muli %arg0, %c1_i32 : i32
    %1 = arith.addi %0, %arg1 : i32
    %c0_i32 = arith.constant 0 : i32
    %c0_i32_0 = arith.constant 0 : i32
    return %1, %c0_i32 : i32, i32
  }
  func.func @transform_1(%arg0: i32, %arg1: i32) -> (i32, i32) {
    %c1_i32 = arith.constant 1 : i32
    %0 = arith.muli %arg0, %c1_i32 : i32
    %1 = arith.addi %0, %arg1 : i32
    %c0_i32 = arith.constant 0 : i32
    %c0_i32_0 = arith.constant 0 : i32
    return %1, %c0_i32 : i32, i32
  }
  func.func @transform_2(%arg0: i32, %arg1: i32) -> (i32, i32, i32) {
    %c0_i32 = arith.constant 0 : i32
    %c0_i32_0 = arith.constant 0 : i32
    %c0_i32_1 = arith.constant 0 : i32
    return %arg0, %c0_i32, %c0_i32_0 : i32, i32, i32
  }
}

</mosaic_0001>

<llo_original>
// kernel: tpu_custom_call.1
$region0: #{tpu_custom_call.1}
  #allocation0 [shape = 'u32[]', space=smem, size = 0x4, offset = 0x4, fixed_abs, tag = 'smem constant byte address 0x4 - core index']
  #allocation1 [shape = 'u32[144,128]{1,0:T(1,128)}', space=vmem, size = 0x12000, scoped, tag = 'internal scratch']
  %s0 = inlined_call_operand.hbm [shape: f32[16,128], index: 0, kind: input, shape index: {}]
  %s1 = inlined_call_operand.hbm [shape: f32[16,128], index: 1, kind: input, shape index: {}]
  %s2 = inlined_call_operand.hbm [shape: f32[2,8,128], index: 2, kind: output, shape index: {}]
  %s3 = sld [smem:[#allocation0]]
  $region53: #{tpu_custom_call.1} parent=0
    _
  %s5 = ssub.s32 1, %s3
  %s6 = scalar_select 0, %s5, %s3
  $region1: #{tpu_custom_call.1} parent=0
    #allocation2 [shape = 'u8[8192]{0}', space=vmem, size = 0x2000, scoped, tag = 'input window, operand 0']
    #allocation3 [shape = 's32[2]{0}', space=sflag, size = 0x8, scoped, tag = 'scoped memory for tpu_custom_call.1']
    #allocation4 [shape = 's32[2]{0}', space=sflag, size = 0x8, scoped, tag = 'scoped memory for tpu_custom_call.1']
    #allocation5 [shape = 'u8[8192]{0}', space=vmem, size = 0x2000, scoped, tag = 'input window, operand 1']
    #allocation6 [shape = 's32[2]{0}', space=sflag, size = 0x8, scoped, tag = 'scoped memory for tpu_custom_call.1']
    #allocation7 [shape = 'u8[8192]{0}', space=vmem, size = 0x2000, scoped, tag = 'output window, operand 0']
    %7 = vsyncpa [#allocation3], 0
    %s8 = scalar_lea.sflag [#allocation3], 1
    %9 = vsyncpa %s8, 0
    %10 = vsyncpa [#allocation6], 0
    %s11 = scalar_lea.sflag [#allocation6], 1
    %12 = vsyncpa %s11, 0
    %13 = vsyncpa [#allocation4], 0
    %s14 = scalar_lea.sflag [#allocation4], 1
    %15 = vsyncpa %s14, 0
    loop: start=0, step=1, limit=4
    $region2: #{tpu_custom_call.1} parent=1 // loop_pre_header
      _
    $region3: #{tpu_custom_call.1} parent=1 // loop_header
      %s17 = sphi 0, %s21
      %p18 = scmp.ge.s32.totalorder %s17, 4
      %s24 = sphi 0, %s36
      %s25 = sphi 0, %s32
      %s26 = sphi 0, %s24
      %s27 = sphi 0, %s25
      %s28 = sphi 0, %s26
      %s29 = sphi 0, %s27
      %s41 = sphi 0, %s43
      %s44 = sphi 0, %s41
      %s45 = sphi 0, %s44
      %s61 = sphi 0, %s45
      %s69 = sphi 0, %s71
      %s72 = sphi 0, %s69
      %s73 = sphi 0, %s72
      %s89 = sphi 0, %s73
      %s95 = sphi 0, %s97
      %s98 = sphi 0, %s95
      %s99 = sphi 0, %s98
      %s115 = sphi 0, %s99
    $region4: #{tpu_custom_call.1} parent=1 // loop_header_branch
      %20 = sbr.rel (%p18) target = $region8
    $region5: #{tpu_custom_call.1} parent=1 // loop_body
      %s22 = ssub.s32 %s17, 1
      %s23 = ssub.s32 %s17, 2
      %s30 = sadd.s32 1, %s25
      %p31 = scmp.ge.s32.totalorder %s30, 1
      %s32 = scalar_select %p31, 0, %s30
      %s33 = sadd.s32 1, %s24
      %s34 = scalar_select %p31, %s33, %s24
      %p35 = scmp.ge.s32.totalorder %s34, 2
      %s36 = scalar_select %p35, 0, %s34
      %s37 = sadd.s32 %s24, %s25
      %s38 = sadd.s32 %s36, %s32
      %s39 = ssub.s32 %s37, %s38
      %p40 = scmp.eq.s32.totalorder %s39, 0
      %s42 = sadd.s32 %s41, 1
      %s43 = scalar_select %p40, %s41, %s42
      %p46 = pneg %p40
      %p47 = scmp.eq.s32.totalorder %s17, 1
      %p48 = por %p46, %p47
      %p49 = scmp.ne.s32.totalorder %s41, %s44
      %p50 = scmp.eq.s32.totalorder %s17, 0
      %p51 = por %p49, %p50
      %p52 = scmp.ne.s32.totalorder %s41, %s44
      %p53 = scmp.eq.s32.totalorder %s22, 1
      %p54 = por %p52, %p53
      %p55 = scmp.ne.s32.totalorder %s44, %s45
      %p56 = scmp.eq.s32.totalorder %s22, 0
      %p57 = por %p55, %p56
      %p58 = scmp.ne.s32.totalorder %s44, %s45
      %p59 = scmp.eq.s32.totalorder %s23, 1
      %p60 = por %p58, %p59
      %p62 = scmp.ne.s32.totalorder %s45, %s61
      %p63 = scmp.eq.s32.totalorder %s23, 0
      %p64 = por %p62, %p63
      %s65 = sadd.s32 %s24, %s25
      %s66 = sadd.s32 %s36, %s32
      %s67 = ssub.s32 %s65, %s66
      %p68 = scmp.eq.s32.totalorder %s67, 0
      %s70 = sadd.s32 %s69, 1
      %s71 = scalar_select %p68, %s69, %s70
      %p74 = pneg %p68
      %p75 = scmp.eq.s32.totalorder %s17, 1
      %p76 = por %p74, %p75
      %p77 = scmp.ne.s32.totalorder %s69, %s72
      %p78 = scmp.eq.s32.totalorder %s17, 0
      %p79 = por %p77, %p78
      %p80 = scmp.ne.s32.totalorder %s69, %s72
      %p81 = scmp.eq.s32.totalorder %s22, 1
      %p82 = por %p80, %p81
      %p83 = scmp.ne.s32.totalorder %s72, %s73
      %p84 = scmp.eq.s32.totalorder %s22, 0
      %p85 = por %p83, %p84
      %p86 = scmp.ne.s32.totalorder %s72, %s73
      %p87 = scmp.eq.s32.totalorder %s23, 1
      %p88 = por %p86, %p87
      %p90 = scmp.ne.s32.totalorder %s73, %s89
      %p91 = scmp.eq.s32.totalorder %s23, 0
      %p92 = por %p90, %p91
      %s93 = ssub.s32 %s24, %s36
      %p94 = scmp.eq.s32.totalorder %s93, 0
      %s96 = sadd.s32 %s95, 1
      %s97 = scalar_select %p94, %s95, %s96
      %p100 = pneg %p94
      %p101 = scmp.eq.s32.totalorder %s17, 1
      %p102 = por %p100, %p101
      %p103 = scmp.ne.s32.totalorder %s95, %s98
      %p104 = scmp.eq.s32.totalorder %s17, 0
      %p105 = por %p103, %p104
      %p106 = scmp.ne.s32.totalorder %s95, %s98
      %p107 = scmp.eq.s32.totalorder %s22, 1
      %p108 = por %p106, %p107
      %p109 = scmp.ne.s32.totalorder %s98, %s99
      %p110 = scmp.eq.s32.totalorder %s22, 0
      %p111 = por %p109, %p110
      %p112 = scmp.ne.s32.totalorder %s98, %s99
      %p113 = scmp.eq.s32.totalorder %s23, 1
      %p114 = por %p112, %p113
      %p116 = scmp.ne.s32.totalorder %s99, %s115
      %p117 = scmp.eq.s32.totalorder %s23, 0
      %p118 = por %p116, %p117
      %p119 = scmp.le.s32.totalorder 1, %s17
      %p120 = scmp.lt.s32.totalorder %s17, 3
      %p121 = pnand %p119, %p120
      %p122 = pneg %p121
      // Predicated region
      $region9: #{tpu_custom_call.1} parent=5 // pred_check
        _
      $region10: #{tpu_custom_call.1} parent=5 // pred_check_branch
        %124 = sbr.rel (%p121) target = $region12
      $region11: #{tpu_custom_call.1} parent=5 // pred_region
        %s125 = ssub.s32 %s17, 1
      $region12: #{tpu_custom_call.1} parent=5 // pred_fallthru
        _
      %p126 = scmp.lt.s32.totalorder %s17, 2
      // Predicated region
      $region13: #{tpu_custom_call.1} parent=5 // pred_check
        %p127 = pneg %p126
      $region14: #{tpu_custom_call.1} parent=5 // pred_check_branch
        %129 = sbr.rel (%p127) target = $region16
      $region15: #{tpu_custom_call.1} parent=5 // pred_region
        // Predicated region
        $region17: #{tpu_custom_call.1} parent=15 // pred_check
          %p130 = pneg %p51
        $region18: #{tpu_custom_call.1} parent=15 // pred_check_branch
          %132 = sbr.rel (%p130) target = $region20
        $region19: #{tpu_custom_call.1} parent=15 // pred_region
          %s133 = sand.u32 %s41, 1
          %s134 = scalar_lea.sflag [#allocation3], %s133
          %s135 = sand.u32 %s41, 1
          %s136 = smul.addr %s135, 8
          %s137 = scalar_lea.vmem [#allocation2], %s136
          %s138 = sadd.s32 %s24, %s25
          %s140 = ssub.s32 128, 128
          %141 = vsyncadd %s134, %s140
          %s142 = smul.addr %s138, 128
          %s143 = scalar_lea.hbm %s0, %s142
          %s145 = sshll.u32 %s137, 4
          %s146 = int_to_ptr.vmem [resolvable:$true] %s145
          %148 = dma.hbm_to_vmem [thread:$0]  %s143, 128, %s146, %s134
        $region20: #{tpu_custom_call.1} parent=15 // pred_fallthru
          _
        // Predicated region
        $region21: #{tpu_custom_call.1} parent=15 // pred_check
          %p149 = pneg %p79
        $region22: #{tpu_custom_call.1} parent=15 // pred_check_branch
          %151 = sbr.rel (%p149) target = $region24
        $region23: #{tpu_custom_call.1} parent=15 // pred_region
          %s152 = sand.u32 %s69, 1
          %s153 = scalar_lea.sflag [#allocation6], %s152
          %s154 = sand.u32 %s69, 1
          %s155 = smul.addr %s154, 8
          %s156 = scalar_lea.vmem [#allocation5], %s155
          %s157 = sadd.s32 %s24, %s25
          %s159 = ssub.s32 128, 128
          %160 = vsyncadd %s153, %s159
          %s161 = smul.addr %s157, 128
          %s162 = scalar_lea.hbm %s1, %s161
          %s164 = sshll.u32 %s156, 4
          %s165 = int_to_ptr.vmem [resolvable:$true] %s164
          %167 = dma.hbm_to_vmem [thread:$0]  %s162, 128, %s165, %s153
        $region24: #{tpu_custom_call.1} parent=15 // pred_fallthru
          _
      $region16: #{tpu_custom_call.1} parent=5 // pred_fallthru
        _
      %p168 = scmp.le.s32.totalorder 1, %s17
      %p169 = scmp.lt.s32.totalorder %s17, 3
      %p170 = pnand %p168, %p169
      %p171 = pneg %p170
      // Predicated region
      $region25: #{tpu_custom_call.1} parent=5 // pred_check
        _
      $region26: #{tpu_custom_call.1} parent=5 // pred_check_branch
        %173 = sbr.rel (%p170) target = $region28
      $region27: #{tpu_custom_call.1} parent=5 // pred_region
        %s174 = ssub.s32 %s17, 1
        %s175 = sand.u32 %s44, 1
        %s176 = scalar_lea.sflag [#allocation3], %s175
        %s177 = sand.u32 %s44, 1
        %s178 = smul.addr %s177, 8
        %s179 = scalar_lea.vmem [#allocation2], %s178
        // Predicated region
        $region29: #{tpu_custom_call.1} parent=27 // pred_check
          %p180 = pneg %p57
        $region30: #{tpu_custom_call.1} parent=27 // pred_check_branch
          %182 = sbr.rel (%p180) target = $region32
        $region31: #{tpu_custom_call.1} parent=27 // pred_region
          %183 = dma.done %s176, 128
        $region32: #{tpu_custom_call.1} parent=27 // pred_fallthru
          _
        %s184 = sand.u32 %s72, 1
        %s185 = scalar_lea.sflag [#allocation6], %s184
        %s186 = sand.u32 %s72, 1
        %s187 = smul.addr %s186, 8
        %s188 = scalar_lea.vmem [#allocation5], %s187
        // Predicated region
        $region33: #{tpu_custom_call.1} parent=27 // pred_check
          %p189 = pneg %p85
        $region34: #{tpu_custom_call.1} parent=27 // pred_check_branch
          %191 = sbr.rel (%p189) target = $region36
        $region35: #{tpu_custom_call.1} parent=27 // pred_region
          %192 = dma.done %s185, 128
        $region36: #{tpu_custom_call.1} parent=27 // pred_fallthru
          _
        %s193 = sand.u32 %s44, 1
        %s194 = scalar_lea.sflag [#allocation3], %s193
        %s195 = sand.u32 %s44, 1
        %s196 = smul.addr %s195, 8
        %s197 = scalar_lea.vmem [#allocation2], %s196
        %p198 = pneg %p57
        %p199 = pneg %p54
        %s200 = sand.u32 %s72, 1
        %s201 = scalar_lea.sflag [#allocation6], %s200
        %s202 = sand.u32 %s72, 1
        %s203 = smul.addr %s202, 8
        %s204 = scalar_lea.vmem [#allocation5], %s203
        %p205 = pneg %p85
        %p206 = pneg %p82
        %p207 = pneg %p111
        %p208 = pneg %p108
        %s209 = sand.u32 %s98, 1
        %s210 = scalar_lea.sflag [#allocation4], %s209
        %s211 = sand.u32 %s98, 1
        %s212 = smul.addr %s211, 8
        %s213 = scalar_lea.vmem [#allocation7], %s212
        %s214 = sadd.s32 %s26, %s27
        %s215 = sadd.s32 %s26, %s27
        %v216 = vld [vmem:[%s179] sm:$0xff]
        %v217 = vld [vmem:[%s188] sm:$0xff]
        %v218 = vand.u32 2147483647, %v216
        %v219 = vsub.f32 0.0, %v218
        %v220 = vmul.f32 %v219, 1.442695
        %v221 = vpow.pop %v220
        %v222 = vadd.f32 %v221, 1.0
        %v223 = vlog2.pop %v222
        %v224 = vmul.f32 %v223, 0.6931472
        %v225 = vmul.f32 -0.5, %v221
        %v226 = vadd.f32 %v225, 1.0
        %v227 = vmul.f32 %v226, %v221
        %v228 = vand.u32 2147483647, %v221
        %vm229 = vcmp.lt.f32.partialorder %v228, 0.0004427343
        %v230 = vsel %vm229, %v227, %v224
        %v231 = vmin.f32 %v216, 0.0
        %v232 = vsub.f32 %v231, %v230
        %v233 = vsub.f32 0.0, %v216
        %v234 = vmin.f32 %v233, 0.0
        %v235 = vsub.f32 %v234, %v230
        %v236 = vmul.f32 %v232, 1.442695
        %v237 = vpow.pop %v236
        %v238 = vsub.f32 %v217, %v237
        %v239 = vmul.f32 %v238, %v238
        %v240 = vsub.f32 0.0, %v239
        %v241 = vmul.f32 %v217, 0.25
        %v242 = vmul.f32 %v241, %v232
        %v243 = vsub.f32 1.0, %v217
        %v244 = vmul.f32 %v243, 0.75
        %v245 = vmul.f32 %v244, %v235
        %v246 = vadd.f32 %v242, %v245
        %v247 = vmul.f32 %v246, %v240
        %v248 = vadd.f32 %v247, 0.0
        %p249 = scmp.eq.s32.totalorder %s27, 0
        // Predicated region
        $region37: #{tpu_custom_call.1} parent=27 // pred_check
          %p250 = pneg %p249
        $region38: #{tpu_custom_call.1} parent=27 // pred_check_branch
          %252 = sbr.rel (%p250) target = $region40
        $region39: #{tpu_custom_call.1} parent=27 // pred_region
          %253 = vst [vmem:[%s213] sm:$0xff] 0.0
        $region40: #{tpu_custom_call.1} parent=27 // pred_fallthru
          _
        %v254 = vld [vmem:[%s213] sm:$0xff]
        %v255 = vadd.f32 %v254, %v248
        %256 = vst [vmem:[%s213] sm:$0xff] %v255
        %s257 = sand.u32 %s98, 1
        %s258 = scalar_lea.sflag [#allocation4], %s257
        %s259 = sand.u32 %s98, 1
        %s260 = smul.addr %s259, 8
        %s261 = scalar_lea.vmem [#allocation7], %s260
        // Predicated region
        $region41: #{tpu_custom_call.1} parent=27 // pred_check
          %p262 = pneg %p108
        $region42: #{tpu_custom_call.1} parent=27 // pred_check_branch
          %264 = sbr.rel (%p262) target = $region44
        $region43: #{tpu_custom_call.1} parent=27 // pred_region
          %s266 = ssub.s32 128, 128
          %267 = vsyncadd %s258, %s266
          %s268 = smul.addr %s26, 128
          %s269 = scalar_lea.hbm %s2, %s268
          %s271 = sshll.u32 %s261, 4
          %s272 = int_to_ptr.vmem [resolvable:$true] %s271
          %274 = dma.vmem_to_hbm [thread:$0]  %s272, 128, %s269, %s258
        $region44: #{tpu_custom_call.1} parent=27 // pred_fallthru
          _
      $region28: #{tpu_custom_call.1} parent=5 // pred_fallthru
        _
      %p275 = scmp.le.s32.totalorder 2, %s17
      // Predicated region
      $region45: #{tpu_custom_call.1} parent=5 // pred_check
        %p276 = pneg %p275
      $region46: #{tpu_custom_call.1} parent=5 // pred_check_branch
        %278 = sbr.rel (%p276) target = $region48
      $region47: #{tpu_custom_call.1} parent=5 // pred_region
        %s279 = ssub.s32 %s17, 2
        // Predicated region
        $region49: #{tpu_custom_call.1} parent=47 // pred_check
          %p280 = pneg %p114
        $region50: #{tpu_custom_call.1} parent=47 // pred_check_branch
          %282 = sbr.rel (%p280) target = $region52
        $region51: #{tpu_custom_call.1} parent=47 // pred_region
          %s283 = sand.u32 %s99, 1
          %s284 = scalar_lea.sflag [#allocation4], %s283
          %s285 = sand.u32 %s99, 1
          %s286 = smul.addr %s285, 8
          %s287 = scalar_lea.vmem [#allocation7], %s286
          %288 = dma.done %s284, 128
        $region52: #{tpu_custom_call.1} parent=47 // pred_fallthru
          _
      $region48: #{tpu_custom_call.1} parent=5 // pred_fallthru
        _
    $region6: #{tpu_custom_call.1} parent=1 // loop_footer
      %s21 = sadd.s32 1, %s17
    $region7: #{tpu_custom_call.1} parent=1 // loop_footer_branch
      %16 = sbr.rel target = $region3
    $region8: #{tpu_custom_call.1} parent=1 // loop_exit
      _
    %289 = vsyncpa [#allocation3], 1
    %s290 = scalar_lea.sflag [#allocation3], 1
    %291 = vsyncpa %s290, 1
    %292 = vsyncpa [#allocation6], 1
    %s293 = scalar_lea.sflag [#allocation6], 1
    %294 = vsyncpa %s293, 1
    %295 = vsyncpa [#allocation4], 1
    %s296 = scalar_lea.sflag [#allocation4], 1
    %297 = vsyncpa %s296, 1

</llo_original>
